<compile_context>
chip_gen: v6e
topology: v6e:2x2x1
jax: 0.10.0
libtpu: 0.0.40
codegen_flags: <defaults>
</compile_context>

<pallas_src>
import jax
import jax.numpy as jnp
import numpy as np
from jax.experimental import pallas as pl
from jax.experimental.pallas import tpu as pltpu

EPS = 1e-5


def _stats_kernel(p_ref, w_ref, psum_ref, psumsq_ref):
    # p_ref: (1, K, tm) bf16 ; w_ref: (1, Cout, K) bf16
    # y: (Cout, tm) f32 -- Cout in sublanes, spatial in lanes.
    y = jnp.dot(w_ref[0], p_ref[0], preferred_element_type=jnp.float32)
    psum_ref[0] = jnp.sum(y, axis=1, keepdims=True)          # (Cout, 1)
    psumsq_ref[0] = jnp.sum(y * y, axis=1, keepdims=True)    # (Cout, 1)


def _bn_relu_kernel(p_ref, w_ref, scale_ref, shift_ref, y_ref):
    # Recompute the cheap matmul (K=4*Cin) instead of round-tripping y via HBM.
    y = jnp.dot(w_ref[0], p_ref[0], preferred_element_type=jnp.float32)  # (Cout, tm)
    z = jnp.maximum(y * scale_ref[...] + shift_ref[...], 0.0)
    y_ref[0] = z.astype(y_ref.dtype)                          # lane-dense store


def _pick_tm(m_in, cap=2048):
    """Lane tile over spatial rows: full extent if small, else a 128-multiple divisor."""
    if m_in <= cap:
        return m_in
    for cand in range(cap - cap % 128, 127, -128):
        if m_in % cand == 0:
            return cand
    return m_in  # fallback: single tile


def unet_up_forward(x, skip, w, gamma, beta):
    """x: (N, Cin, H, W); skip: (N, Cskip, 2H, 2W); w: (Cin, Cout, 4, 4)."""
    n, c_in, h, wd = x.shape
    c_out = w.shape[1]
    ho, wo = 2 * h, 2 * wd
    m_in = n * h * wd          # rows per phase
    m_total = 4 * m_in         # = N*Ho*Wo (BN statistics population)
    k_dim = 4 * c_in

    # ---- glue: sub-pixel decomposition of ConvTranspose2d(4,2,1) -----------
    # out[n, 2p+ry, 2q+rx, co] = sum_{dy,dx,ci} xpad[n, p+ry+dy, q+rx+dx, ci]
    #                                           * w[ci, co, khs[ry][dy], kws[rx][dx]]
    x_nhwc = jnp.transpose(x, (0, 2, 3, 1))                     # (N, H, W, Cin)
    xpad = jnp.pad(x_nhwc, ((0, 0), (1, 1), (1, 1), (0, 0)))    # (N, H+2, W+2, Cin)
    khs = ((3, 1), (2, 0))   # [ry][dy] -> kernel row
    kws = ((3, 1), (2, 0))   # [rx][dx] -> kernel col

    p_list, w_list = [], []
    for ry in range(2):
        for rx in range(2):
            slabs = [xpad[:, ry + dy:ry + dy + h, rx + dx:rx + dx + wd, :]
                     for dy in range(2) for dx in range(2)]      # 4 x (N,H,W,Cin)
            pt = jnp.stack(slabs, axis=0)                        # (4, N, H, W, Cin)
            # K index = (dy*2+dx)*Cin + ci ; M index = flat (n, h, w)
            p_list.append(jnp.transpose(pt, (0, 4, 1, 2, 3)).reshape(k_dim, m_in))
            cols = [w[:, :, khs[ry][dy], kws[rx][dx]]            # (Cin, Cout)
                    for dy in range(2) for dx in range(2)]
            w_list.append(jnp.transpose(jnp.stack(cols, axis=0),
                                        (2, 0, 1)).reshape(c_out, k_dim))
    # bf16 MXU operands; accumulation stays f32 inside the kernels.
    p_t = jnp.stack(p_list, axis=0).astype(jnp.bfloat16)   # (4, K, M_in)
    w_t = jnp.stack(w_list, axis=0).astype(jnp.bfloat16)   # (4, Cout, K)

    tm = _pick_tm(m_in)
    n_t = m_in // tm
    cparams = pltpu.CompilerParams(
        dimension_semantics=("parallel", "parallel"),
        vmem_limit_bytes=32 * 1024 * 1024)

    # ---- pass 1: matmul -> per-tile partial BN statistics (tiny outputs) ----
    psum, psumsq = pl.pallas_call(
        _stats_kernel,
        grid=(4, n_t),
        in_specs=[pl.BlockSpec((1, k_dim, tm), lambda ph, i: (ph, 0, i)),
                  pl.BlockSpec((1, c_out, k_dim), lambda ph, i: (ph, 0, 0))],
        out_specs=[pl.BlockSpec((1, c_out, 1), lambda ph, i: (ph * n_t + i, 0, 0)),
                   pl.BlockSpec((1, c_out, 1), lambda ph, i: (ph * n_t + i, 0, 0))],
        out_shape=[jax.ShapeDtypeStruct((4 * n_t, c_out, 1), jnp.float32),
                   jax.ShapeDtypeStruct((4 * n_t, c_out, 1), jnp.float32)],
        compiler_params=cparams,
    )(p_t, w_t)

    # ---- glue: fold stats into per-channel affine (training-mode BN) --------
    total = jnp.sum(psum, axis=0).reshape(c_out)
    total_sq = jnp.sum(psumsq, axis=0).reshape(c_out)
    mean = total / m_total
    var = total_sq / m_total - mean * mean       # biased variance (BN training mode)
    inv = gamma / jnp.sqrt(var + EPS)
    scale = inv.reshape(c_out, 1).astype(jnp.float32)
    shift = (beta - mean * inv).reshape(c_out, 1).astype(jnp.float32)

    # ---- pass 2: recompute matmul + fused BN affine + ReLU (lane-dense) -----
    y_t = pl.pallas_call(
        _bn_relu_kernel,
        grid=(4, n_t),
        in_specs=[pl.BlockSpec((1, k_dim, tm), lambda ph, i: (ph, 0, i)),
                  pl.BlockSpec((1, c_out, k_dim), lambda ph, i: (ph, 0, 0)),
                  pl.BlockSpec((c_out, 1), lambda ph, i: (0, 0)),
                  pl.BlockSpec((c_out, 1), lambda ph, i: (0, 0))],
        out_specs=pl.BlockSpec((1, c_out, tm), lambda ph, i: (ph, 0, i)),
        out_shape=jax.ShapeDtypeStruct((4, c_out, m_in), jnp.float32),
        compiler_params=cparams,
    )(p_t, w_t, scale, shift)

    # ---- glue: interleave the 4 phases back to NCHW, concat skip (XLA slab) -
    y6 = y_t.reshape(2, 2, c_out, n, h, wd)                  # (ry, rx, Co, N, H, W)
    y_nchw = jnp.transpose(y6, (3, 2, 4, 0, 5, 1)).reshape(n, c_out, ho, wo)
    return jnp.concatenate([y_nchw, skip], axis=1)


def unet_up_reference(x, skip, w, gamma, beta):
    """Pure-JAX f32 reference matching PyTorch semantics (training-mode BN)."""
    w_conv = jnp.transpose(jnp.flip(w, (2, 3)), (1, 0, 2, 3))  # (Cout, Cin, 4, 4)
    y = jax.lax.conv_general_dilated(
        x, w_conv, window_strides=(1, 1), padding=((2, 2), (2, 2)),
        lhs_dilation=(2, 2), dimension_numbers=('NCHW', 'OIHW', 'NCHW'))
    mean = y.mean(axis=(0, 2, 3), keepdims=True)
    var = ((y - mean) ** 2).mean(axis=(0, 2, 3), keepdims=True)
    yn = (y - mean) / jnp.sqrt(var + EPS)
    yn = yn * gamma[None, :, None, None] + beta[None, :, None, None]
    yn = jnp.maximum(yn, 0.0)
    return jnp.concatenate([yn, skip], axis=1)


if __name__ == "__main__":
    # small shapes consistent with the module: in_size=4, out_size=8
    N, IN_SIZE, OUT_SIZE, H, W = 2, 4, 8, 16, 16
    C_SKIP = 8

    key = jax.random.PRNGKey(0)
    kx, ks, kw, kg, kb = jax.random.split(key, 5)
    x = jax.random.normal(kx, (N, IN_SIZE, H, W), jnp.float32)
    skip = jax.random.normal(ks, (N, C_SKIP, 2 * H, 2 * W), jnp.float32)
    # ConvTranspose2d weight: (in_size, out_size, 4, 4), bias=False
    w = 0.1 * jax.random.normal(kw, (IN_SIZE, OUT_SIZE, 4, 4), jnp.float32)
    # BatchNorm2d affine params (deterministic synthetic init)
    gamma = 1.0 + 0.1 * jax.random.normal(kg, (OUT_SIZE,), jnp.float32)
    beta = 0.1 * jax.random.normal(kb, (OUT_SIZE,), jnp.float32)
    # TODO(synk): BN running-stat update (momentum=0.8) is a training-time side
    # effect and does not change this forward output; it is not materialized.

    fwd = jax.jit(unet_up_forward)
    out = jax.block_until_ready(fwd(x, skip, w, gamma, beta))
    ref = jax.block_until_ready(unet_up_reference(x, skip, w, gamma, beta))

    assert out.shape == (N, OUT_SIZE + C_SKIP, 2 * H, 2 * W), out.shape
    # Tolerance covers bf16 MXU operands (f32 accumulation): analytic worst-case
    # element error ~1.5e-2 on O(1) post-BN activations; structural bugs give O(1).
    np.testing.assert_allclose(np.asarray(out), np.asarray(ref),
                               rtol=3e-2, atol=3e-2)
    print("KERNEL_OK")
</pallas_src>

<mosaic_0001>
module attributes {stable_mosaic.version = 11 : i64} {
  func.func @_stats_kernel(%arg0: i32, %arg1: i32, %arg2: memref<1x16x512xbf16, #tpu.memory_space<vmem>>, %arg3: memref<1x8x16xbf16, #tpu.memory_space<vmem>>, %arg4: memref<1x8x1xf32, #tpu.memory_space<vmem>>, %arg5: memref<1x8x1xf32, #tpu.memory_space<vmem>>) attributes {dimension_semantics = [#tpu.dimension_semantics<parallel>, #tpu.dimension_semantics<parallel>], iteration_bounds = array<i64: 4, 1>, scalar_prefetch = 0 : i64, scratch_operands = 0 : i64, tpu.core_type = #tpu.core_type<tc>, window_params = [{transform_indices = @transform_0, window_bounds = array<i64: 1, 16, 512>}, {transform_indices = @transform_1, window_bounds = array<i64: 1, 8, 16>}, {transform_indices = @transform_2, window_bounds = array<i64: 1, 8, 1>}, {transform_indices = @transform_3, window_bounds = array<i64: 1, 8, 1>}]} {
    %c0 = arith.constant 0 : index
    %c0_0 = arith.constant 0 : index
    %c0_1 = arith.constant 0 : index
    %0 = vector.load %arg3[%c0, %c0_0, %c0_1] : memref<1x8x16xbf16, #tpu.memory_space<vmem>>, vector<1x8x16xbf16>
    %1 = vector.shape_cast %0 : vector<1x8x16xbf16> to vector<8x16xbf16>
    %c0_2 = arith.constant 0 : index
    %c0_3 = arith.constant 0 : index
    %c0_4 = arith.constant 0 : index
    %2 = vector.load %arg2[%c0_2, %c0_3, %c0_4] : memref<1x16x512xbf16, #tpu.memory_space<vmem>>, vector<1x16x512xbf16>
    %3 = vector.shape_cast %2 : vector<1x16x512xbf16> to vector<16x512xbf16>
    %cst = arith.constant dense<0.000000e+00> : vector<8x512xf32>
    %4 = tpu.matmul %1, %3, %cst {dimension_numbers = #tpu.dot_dimension_numbers<[1], [0], [0], [1], [0, 0, 1, 1], [], []>} : vector<8x16xbf16>, vector<16x512xbf16>, vector<8x512xf32> -> vector<8x512xf32>
    %cst_5 = arith.constant dense<0.000000e+00> : vector<8xf32>
    %5 = vector.multi_reduction <add>, %4, %cst_5 [1] : vector<8x512xf32> to vector<8xf32>
    %6 = vector.shape_cast %5 : vector<8xf32> to vector<8x1xf32>
    %c0_6 = arith.constant 0 : index
    %c0_7 = arith.constant 0 : index
    %c0_8 = arith.constant 0 : index
    %7 = vector.load %arg4[%c0_6, %c0_7, %c0_8] : memref<1x8x1xf32, #tpu.memory_space<vmem>>, vector<1x8x1xf32>
    %8 = vector.shape_cast %7 : vector<1x8x1xf32> to vector<8x1xf32>
    %9 = vector.shape_cast %6 : vector<8x1xf32> to vector<1x8x1xf32>
    tpu.vector_store %arg4[%c0_6, %c0_7, %c0_8], %9 {strides = array<i32>} : memref<1x8x1xf32, #tpu.memory_space<vmem>>, vector<1x8x1xf32>,
    %10 = arith.mulf %4, %4 : vector<8x512xf32>
    %cst_9 = arith.constant dense<0.000000e+00> : vector<8xf32>
    %11 = vector.multi_reduction <add>, %10, %cst_9 [1] : vector<8x512xf32> to vector<8xf32>
    %12 = vector.shape_cast %11 : vector<8xf32> to vector<8x1xf32>
    %c0_10 = arith.constant 0 : index
    %c0_11 = arith.constant 0 : index
    %c0_12 = arith.constant 0 : index
    %13 = vector.load %arg5[%c0_10, %c0_11, %c0_12] : memref<1x8x1xf32, #tpu.memory_space<vmem>>, vector<1x8x1xf32>
    %14 = vector.shape_cast %13 : vector<1x8x1xf32> to vector<8x1xf32>
    %15 = vector.shape_cast %12 : vector<8x1xf32> to vector<1x8x1xf32>
    tpu.vector_store %arg5[%c0_10, %c0_11, %c0_12], %15 {strides = array<i32>} : memref<1x8x1xf32, #tpu.memory_space<vmem>>, vector<1x8x1xf32>,
    return
  }
  func.func @transform_0(%arg0: i32, %arg1: i32) -> (i32, i32, i32) {
    %c0_i32 = arith.constant 0 : i32
    %c0_i32_0 = arith.constant 0 : i32
    return %arg0, %c0_i32, %arg1 : i32, i32, i32
  }
  func.func @transform_1(%arg0: i32, %arg1: i32) -> (i32, i32, i32) {
    %c0_i32 = arith.constant 0 : i32
    %c0_i32_0 = arith.constant 0 : i32
    %c0_i32_1 = arith.constant 0 : i32
    return %arg0, %c0_i32, %c0_i32_0 : i32, i32, i32
  }
  func.func @transform_2(%arg0: i32, %arg1: i32) -> (i32, i32, i32) {
    %c1_i32 = arith.constant 1 : i32
    %0 = arith.muli %arg0, %c1_i32 : i32
    %1 = arith.addi %0, %arg1 : i32
    %c0_i32 = arith.constant 0 : i32
    %c0_i32_0 = arith.constant 0 : i32
    %c0_i32_1 = arith.constant 0 : i32
    return %1, %c0_i32, %c0_i32_0 : i32, i32, i32
  }
  func.func @transform_3(%arg0: i32, %arg1: i32) -> (i32, i32, i32) {
    %c1_i32 = arith.constant 1 : i32
    %0 = arith.muli %arg0, %c1_i32 : i32
    %1 = arith.addi %0, %arg1 : i32
    %c0_i32 = arith.constant 0 : i32
    %c0_i32_0 = arith.constant 0 : i32
    %c0_i32_1 = arith.constant 0 : i32
    return %1, %c0_i32, %c0_i32_0 : i32, i32, i32
  }
}

module attributes {stable_mosaic.version = 11 : i64} {
  func.func @_bn_relu_kernel(%arg0: i32, %arg1: i32, %arg2: memref<1x16x512xbf16, #tpu.memory_space<vmem>>, %arg3: memref<1x8x16xbf16, #tpu.memory_space<vmem>>, %arg4: memref<8x1xf32, #tpu.memory_space<vmem>>, %arg5: memref<8x1xf32, #tpu.memory_space<vmem>>, %arg6: memref<1x8x512xf32, #tpu.memory_space<vmem>>) attributes {dimension_semantics = [#tpu.dimension_semantics<parallel>, #tpu.dimension_semantics<parallel>], iteration_bounds = array<i64: 4, 1>, scalar_prefetch = 0 : i64, scratch_operands = 0 : i64, tpu.core_type = #tpu.core_type<tc>, window_params = [{transform_indices = @transform_0, window_bounds = array<i64: 1, 16, 512>}, {transform_indices = @transform_1, window_bounds = array<i64: 1, 8, 16>}, {pipeline_mode = #tpu.pipeline_mode<synchronous>, transform_indices = @transform_2, window_bounds = array<i64: 8, 1>}, {pipeline_mode = #tpu.pipeline_mode<synchronous>, transform_indices = @transform_3, window_bounds = array<i64: 8, 1>}, {transform_indices = @transform_4, window_bounds = array<i64: 1, 8, 512>}]} {
    %c0 = arith.constant 0 : index
    %c0_0 = arith.constant 0 : index
    %c0_1 = arith.constant 0 : index
    %0 = vector.load %arg3[%c0, %c0_0, %c0_1] : memref<1x8x16xbf16, #tpu.memory_space<vmem>>, vector<1x8x16xbf16>
    %1 = vector.shape_cast %0 : vector<1x8x16xbf16> to vector<8x16xbf16>
    %c0_2 = arith.constant 0 : index
    %c0_3 = arith.constant 0 : index
    %c0_4 = arith.constant 0 : index
    %2 = vector.load %arg2[%c0_2, %c0_3, %c0_4] : memref<1x16x512xbf16, #tpu.memory_space<vmem>>, vector<1x16x512xbf16>
    %3 = vector.shape_cast %2 : vector<1x16x512xbf16> to vector<16x512xbf16>
    %cst = arith.constant dense<0.000000e+00> : vector<8x512xf32>
    %4 = tpu.matmul %1, %3, %cst {dimension_numbers = #tpu.dot_dimension_numbers<[1], [0], [0], [1], [0, 0, 1, 1], [], []>} : vector<8x16xbf16>, vector<16x512xbf16>, vector<8x512xf32> -> vector<8x512xf32>
    %c0_5 = arith.constant 0 : index
    %c0_6 = arith.constant 0 : index
    %5 = vector.load %arg4[%c0_5, %c0_6] : memref<8x1xf32, #tpu.memory_space<vmem>>, vector<8x1xf32>
    %6 = vector.broadcast %5 : vector<8x1xf32> to vector<8x512xf32>
    %7 = arith.mulf %4, %6 : vector<8x512xf32>
    %c0_7 = arith.constant 0 : index
    %c0_8 = arith.constant 0 : index
    %8 = vector.load %arg5[%c0_7, %c0_8] : memref<8x1xf32, #tpu.memory_space<vmem>>, vector<8x1xf32>
    %9 = vector.broadcast %8 : vector<8x1xf32> to vector<8x512xf32>
    %10 = arith.addf %7, %9 : vector<8x512xf32>
    %cst_9 = arith.constant 0.000000e+00 : f32
    %11 = vector.broadcast %cst_9 : f32 to vector<8x512xf32>
    %12 = arith.maximumf %10, %11 : vector<8x512xf32>
    %c0_10 = arith.constant 0 : index
    %c0_11 = arith.constant 0 : index
    %c0_12 = arith.constant 0 : index
    %13 = vector.load %arg6[%c0_10, %c0_11, %c0_12] : memref<1x8x512xf32, #tpu.memory_space<vmem>>, vector<1x8x512xf32>
    %14 = vector.shape_cast %13 : vector<1x8x512xf32> to vector<8x512xf32>
    %15 = vector.shape_cast %12 : vector<8x512xf32> to vector<1x8x512xf32>
    tpu.vector_store %arg6[%c0_10, %c0_11, %c0_12], %15 {strides = array<i32>} : memref<1x8x512xf32, #tpu.memory_space<vmem>>, vector<1x8x512xf32>,
    return
  }
  func.func @transform_0(%arg0: i32, %arg1: i32) -> (i32, i32, i32) {
    %c0_i32 = arith.constant 0 : i32
    %c0_i32_0 = arith.constant 0 : i32
    return %arg0, %c0_i32, %arg1 : i32, i32, i32
  }
  func.func @transform_1(%arg0: i32, %arg1: i32) -> (i32, i32, i32) {
    %c0_i32 = arith.constant 0 : i32
    %c0_i32_0 = arith.constant 0 : i32
    %c0_i32_1 = arith.constant 0 : i32
    return %arg0, %c0_i32, %c0_i32_0 : i32, i32, i32
  }
  func.func @transform_2(%arg0: i32, %arg1: i32) -> (i32, i32) {
    %c0_i32 = arith.constant 0 : i32
    %c0_i32_0 = arith.constant 0 : i32
    %c0_i32_1 = arith.constant 0 : i32
    return %c0_i32, %c0_i32_0 : i32, i32
  }
  func.func @transform_3(%arg0: i32, %arg1: i32) -> (i32, i32) {
    %c0_i32 = arith.constant 0 : i32
    %c0_i32_0 = arith.constant 0 : i32
    %c0_i32_1 = arith.constant 0 : i32
    return %c0_i32, %c0_i32_0 : i32, i32
  }
  func.func @transform_4(%arg0: i32, %arg1: i32) -> (i32, i32, i32) {
    %c0_i32 = arith.constant 0 : i32
    %c0_i32_0 = arith.constant 0 : i32
    return %arg0, %c0_i32, %arg1 : i32, i32, i32
  }
}

</mosaic_0001>

<llo_original>
// kernel: unet_up_forward.2
$region0: #{unet_up_forward.2}
  #allocation0 [shape = 'u32[]', space=smem, size = 0x4, offset = 0x4, fixed_abs, tag = 'smem constant byte address 0x4 - core index']
  #allocation1 [shape = 'u32[144,128]{1,0:T(1,128)}', space=vmem, size = 0x12000, scoped, tag = 'internal scratch']
  %s0 = inlined_call_operand.vmem [shape: bf16[4,16,512], index: 0, kind: input, shape index: {}]
  %s1 = inlined_call_operand.vmem [shape: bf16[4,8,16], index: 1, kind: input, shape index: {}]
  %s2 = inlined_call_operand.vmem [shape: f32[4,8,1], index: 2, kind: output, shape index: {0}]
  %s3 = inlined_call_operand.vmem [shape: f32[4,8,1], index: 3, kind: output, shape index: {1}]
  %4 = xla_tuple %s2, %s3
  %s5 = sld [smem:[#allocation0]]
  $region49: #{unet_up_forward.2} parent=0
    _
  %s7 = ssub.s32 1, %s5
  %s8 = scalar_select 0, %s7, %s5
  loop: start=0, step=1, limit=6
  $region2: #{unet_up_forward.2} parent=0 // loop_pre_header
    _
  $region3: #{unet_up_forward.2} parent=0 // loop_header
    %s10 = sphi 0, %s14
    %p11 = scmp.ge.s32.totalorder %s10, 6
    %s17 = sphi 0, %s29
    %s18 = sphi 0, %s25
    %s19 = sphi 0, %s17
    %s20 = sphi 0, %s18
    %s21 = sphi 0, %s19
    %s22 = sphi 0, %s20
    %s34 = sphi 0, %s36
    %s37 = sphi 0, %s34
    %s38 = sphi 0, %s37
    %s54 = sphi 0, %s38
    %s60 = sphi 0, %s62
    %s63 = sphi 0, %s60
    %s64 = sphi 0, %s63
    %s80 = sphi 0, %s64
    %s88 = sphi 0, %s90
    %s91 = sphi 0, %s88
    %s92 = sphi 0, %s91
    %s108 = sphi 0, %s92
    %s116 = sphi 0, %s118
    %s119 = sphi 0, %s116
    %s120 = sphi 0, %s119
    %s136 = sphi 0, %s120
  $region4: #{unet_up_forward.2} parent=0 // loop_header_branch
    %13 = sbr.rel (%p11) target = $region8
  $region5: #{unet_up_forward.2} parent=0 // loop_body
    %s15 = ssub.s32 %s10, 1
    %s16 = ssub.s32 %s10, 2
    %s23 = sadd.s32 1, %s18
    %p24 = scmp.ge.s32.totalorder %s23, 1
    %s25 = scalar_select %p24, 0, %s23
    %s26 = sadd.s32 1, %s17
    %s27 = scalar_select %p24, %s26, %s17
    %p28 = scmp.ge.s32.totalorder %s27, 4
    %s29 = scalar_select %p28, 0, %s27
    %s30 = ssub.s32 %s17, %s29
    %s31 = ssub.s32 %s18, %s25
    %s32 = sor.u32 %s30, %s31
    %p33 = scmp.eq.s32.totalorder %s32, 0
    %s35 = sadd.s32 %s34, 1
    %s36 = scalar_select %p33, %s34, %s35
    %p39 = pneg %p33
    %p40 = scmp.eq.s32.totalorder %s10, 3
    %p41 = por %p39, %p40
    %p42 = scmp.ne.s32.totalorder %s34, %s37
    %p43 = scmp.eq.s32.totalorder %s10, 0
    %p44 = por %p42, %p43
    %p45 = scmp.ne.s32.totalorder %s34, %s37
    %p46 = scmp.eq.s32.totalorder %s15, 3
    %p47 = por %p45, %p46
    %p48 = scmp.ne.s32.totalorder %s37, %s38
    %p49 = scmp.eq.s32.totalorder %s15, 0
    %p50 = por %p48, %p49
    %p51 = scmp.ne.s32.totalorder %s37, %s38
    %p52 = scmp.eq.s32.totalorder %s16, 3
    %p53 = por %p51, %p52
    %p55 = scmp.ne.s32.totalorder %s38, %s54
    %p56 = scmp.eq.s32.totalorder %s16, 0
    %p57 = por %p55, %p56
    %s58 = ssub.s32 %s17, %s29
    %p59 = scmp.eq.s32.totalorder %s58, 0
    %s61 = sadd.s32 %s60, 1
    %s62 = scalar_select %p59, %s60, %s61
    %p65 = pneg %p59
    %p66 = scmp.eq.s32.totalorder %s10, 3
    %p67 = por %p65, %p66
    %p68 = scmp.ne.s32.totalorder %s60, %s63
    %p69 = scmp.eq.s32.totalorder %s10, 0
    %p70 = por %p68, %p69
    %p71 = scmp.ne.s32.totalorder %s60, %s63
    %p72 = scmp.eq.s32.totalorder %s15, 3
    %p73 = por %p71, %p72
    %p74 = scmp.ne.s32.totalorder %s63, %s64
    %p75 = scmp.eq.s32.totalorder %s15, 0
    %p76 = por %p74, %p75
    %p77 = scmp.ne.s32.totalorder %s63, %s64
    %p78 = scmp.eq.s32.totalorder %s16, 3
    %p79 = por %p77, %p78
    %p81 = scmp.ne.s32.totalorder %s64, %s80
    %p82 = scmp.eq.s32.totalorder %s16, 0
    %p83 = por %p81, %p82
    %s84 = sadd.s32 %s17, %s18
    %s85 = sadd.s32 %s29, %s25
    %s86 = ssub.s32 %s84, %s85
    %p87 = scmp.eq.s32.totalorder %s86, 0
    %s89 = sadd.s32 %s88, 1
    %s90 = scalar_select %p87, %s88, %s89
    %p93 = pneg %p87
    %p94 = scmp.eq.s32.totalorder %s10, 3
    %p95 = por %p93, %p94
    %p96 = scmp.ne.s32.totalorder %s88, %s91
    %p97 = scmp.eq.s32.totalorder %s10, 0
    %p98 = por %p96, %p97
    %p99 = scmp.ne.s32.totalorder %s88, %s91
    %p100 = scmp.eq.s32.totalorder %s15, 3
    %p101 = por %p99, %p100
    %p102 = scmp.ne.s32.totalorder %s91, %s92
    %p103 = scmp.eq.s32.totalorder %s15, 0
    %p104 = por %p102, %p103
    %p105 = scmp.ne.s32.totalorder %s91, %s92
    %p106 = scmp.eq.s32.totalorder %s16, 3
    %p107 = por %p105, %p106
    %p109 = scmp.ne.s32.totalorder %s92, %s108
    %p110 = scmp.eq.s32.totalorder %s16, 0
    %p111 = por %p109, %p110
    %s112 = sadd.s32 %s17, %s18
    %s113 = sadd.s32 %s29, %s25
    %s114 = ssub.s32 %s112, %s113
    %p115 = scmp.eq.s32.totalorder %s114, 0
    %s117 = sadd.s32 %s116, 1
    %s118 = scalar_select %p115, %s116, %s117
    %p121 = pneg %p115
    %p122 = scmp.eq.s32.totalorder %s10, 3
    %p123 = por %p121, %p122
    %p124 = scmp.ne.s32.totalorder %s116, %s119
    %p125 = scmp.eq.s32.totalorder %s10, 0
    %p126 = por %p124, %p125
    %p127 = scmp.ne.s32.totalorder %s116, %s119
    %p128 = scmp.eq.s32.totalorder %s15, 3
    %p129 = por %p127, %p128
    %p130 = scmp.ne.s32.totalorder %s119, %s120
    %p131 = scmp.eq.s32.totalorder %s15, 0
    %p132 = por %p130, %p131
    %p133 = scmp.ne.s32.totalorder %s119, %s120
    %p134 = scmp.eq.s32.totalorder %s16, 3
    %p135 = por %p133, %p134
    %p137 = scmp.ne.s32.totalorder %s120, %s136
    %p138 = scmp.eq.s32.totalorder %s16, 0
    %p139 = por %p137, %p138
    %p140 = scmp.le.s32.totalorder 1, %s10
    %p141 = scmp.lt.s32.totalorder %s10, 5
    %p142 = pnand %p140, %p141
    %p143 = pneg %p142
    // Predicated region
    $region9: #{unet_up_forward.2} parent=5 // pred_check
      _
    $region10: #{unet_up_forward.2} parent=5 // pred_check_branch
      %145 = sbr.rel (%p142) target = $region12
    $region11: #{unet_up_forward.2} parent=5 // pred_region
      %s146 = ssub.s32 %s10, 1
    $region12: #{unet_up_forward.2} parent=5 // pred_fallthru
      _
    %p147 = scmp.lt.s32.totalorder %s10, 4
    // Predicated region
    $region13: #{unet_up_forward.2} parent=5 // pred_check
      %p148 = pneg %p147
    $region14: #{unet_up_forward.2} parent=5 // pred_check_branch
      %150 = sbr.rel (%p148) target = $region16
    $region15: #{unet_up_forward.2} parent=5 // pred_region
      // Predicated region
      $region17: #{unet_up_forward.2} parent=15 // pred_check
        %p151 = pneg %p44
      $region18: #{unet_up_forward.2} parent=15 // pred_check_branch
        %153 = sbr.rel (%p151) target = $region20
      $region19: #{unet_up_forward.2} parent=15 // pred_region
        %s154 = smul.u32 4, %s18
        %p155 = scmp.lt.s32.totalorder %s17, 3
        %s156 = scalar_select %p155, %s17, 3
        %p157 = scmp.lt.s32.totalorder %s154, 3
        %s158 = scalar_select %p157, %s154, 3
        %s159 = smul.addr %s156, 8
        %s160 = sadd.s32 %s158, %s159
        %s161 = smul.addr %s160, 4
        %s162 = scalar_lea.vmem %s0, %s161
        %s163 = smul.u32 4, %s18
      $region20: #{unet_up_forward.2} parent=15 // pred_fallthru
        _
      // Predicated region
      $region21: #{unet_up_forward.2} parent=15 // pred_check
        %p164 = pneg %p70
      $region22: #{unet_up_forward.2} parent=15 // pred_check_branch
        %166 = sbr.rel (%p164) target = $region24
      $region23: #{unet_up_forward.2} parent=15 // pred_region
        %p167 = scmp.lt.s32.totalorder %s17, 3
        %s168 = scalar_select %p167, %s17, 3
        %s169 = smul.addr %s168, 4
        %s170 = scalar_lea.vmem %s1, %s169
      $region24: #{unet_up_forward.2} parent=15 // pred_fallthru
        _
    $region16: #{unet_up_forward.2} parent=5 // pred_fallthru
      _
    %p171 = scmp.le.s32.totalorder 1, %s10
    %p172 = scmp.lt.s32.totalorder %s10, 5
    %p173 = pnand %p171, %p172
    %p174 = pneg %p173
    // Predicated region
    $region25: #{unet_up_forward.2} parent=5 // pred_check
      _
    $region26: #{unet_up_forward.2} parent=5 // pred_check_branch
      %176 = sbr.rel (%p173) target = $region28
    $region27: #{unet_up_forward.2} parent=5 // pred_region
      %s177 = ssub.s32 %s10, 1
      %s178 = smul.u32 4, %s20
      %p179 = scmp.lt.s32.totalorder %s19, 3
      %s180 = scalar_select %p179, %s19, 3
      %p181 = scmp.lt.s32.totalorder %s178, 3
      %s182 = scalar_select %p181, %s178, 3
      %s183 = smul.addr %s180, 8
      %s184 = sadd.s32 %s182, %s183
      %s185 = smul.addr %s184, 4
      %s186 = scalar_lea.vmem %s0, %s185
      %p187 = pneg %p50
      %p188 = pneg %p47
      %p189 = scmp.lt.s32.totalorder %s19, 3
      %s190 = scalar_select %p189, %s19, 3
      %s191 = smul.addr %s190, 4
      %s192 = scalar_lea.vmem %s1, %s191
      %p193 = pneg %p76
      %p194 = pneg %p73
      %p195 = pneg %p104
      %p196 = pneg %p101
      %s197 = sadd.s32 %s19, %s20
      %p198 = scmp.lt.s32.totalorder %s197, 3
      %s199 = scalar_select %p198, %s197, 3
      %s200 = smul.addr %s199, 8
      %s201 = scalar_lea.vmem %s2, %s200
      %p202 = pneg %p132
      %p203 = pneg %p129
      %s204 = sadd.s32 %s19, %s20
      %p205 = scmp.lt.s32.totalorder %s204, 3
      %s206 = scalar_select %p205, %s204, 3
      %s207 = smul.addr %s206, 8
      %s208 = scalar_lea.vmem %s3, %s207
      %s209 = smul.u32 4, %s20
      %p210 = scmp.lt.s32.totalorder %s19, 3
      %s211 = scalar_select %p210, %s19, 3
      %p212 = scmp.lt.s32.totalorder %s209, 3
      %s213 = scalar_select %p212, %s209, 3
      %s214 = smul.addr %s211, 8
      %s215 = sadd.s32 %s213, %s214
      %s216 = smul.addr %s215, 4
      %s217 = scalar_lea.vmem %s0, %s216
      %s218 = smul.u32 4, %s20
      %p219 = scmp.lt.s32.totalorder %s19, 3
      %s220 = scalar_select %p219, %s19, 3
      %s221 = smul.addr %s220, 4
      %s222 = scalar_lea.vmem %s1, %s221
      %s223 = sadd.s32 %s19, %s20
      %p224 = scmp.lt.s32.totalorder %s223, 3
      %s225 = scalar_select %p224, %s223, 3
      %s226 = smul.addr %s225, 8
      %s227 = scalar_lea.vmem %s2, %s226
      %s228 = sadd.s32 %s19, %s20
      %s229 = sadd.s32 %s19, %s20
      %p230 = scmp.lt.s32.totalorder %s229, 3
      %s231 = scalar_select %p230, %s229, 3
      %s232 = smul.addr %s231, 8
      %s233 = scalar_lea.vmem %s3, %s232
      %s234 = sadd.s32 %s19, %s20
      %v236 = vld [vmem:[%s222] sm:$0xf]
      %v237 = vld [vmem:[%s217] sm:$0xff]
      %v238 = vld [vmem:[%s217 + $0x8] sm:$0xff]
      %v239 = vld [vmem:[%s217 + $0x10] sm:$0xff]
      %v240 = vld [vmem:[%s217 + $0x18] sm:$0xff]
      %v245 = vunpack.c.l.b16 %v237
      %v246 = vunpack.c.h.b16 %v237
      %v247 = vunpack.c.l.b16 %v238
      %v248 = vunpack.c.h.b16 %v238
      %v249 = vunpack.c.l.b16 %v239
      %v250 = vunpack.c.h.b16 %v239
      %v251 = vunpack.c.l.b16 %v240
      %v252 = vunpack.c.h.b16 %v240
      %v253 = vpack.c.b16 %v249, %v245
      %v254 = vpack.c.b16 %v250, %v246
      %v255 = vpack.c.b16 %v251, %v247
      %v256 = vpack.c.b16 %v252, %v248
      %vm261 = vcmask 130048
      %v263 = vsel %vm261, %v236, 0
      %265 = vmatprep.subr.bf16.mxu0 0
      %266 = vmatpush1.bf16.msra.mxu0 0
      %267 = vmatprep.subr.bf16.mxu0 0
      %268 = vmatpush1.bf16.msra.mxu0 0
      %269 = vmatprep.subr.bf16.mxu0 0
      %270 = vmatpush1.bf16.msra.mxu0 0
      %271 = vmatprep.subr.bf16.mxu0 0
      %272 = vmatpush1.bf16.msra.mxu0 0
      %273 = vmatprep.subr.bf16.mxu0 0
      %274 = vmatpush1.bf16.msra.mxu0 0
      %275 = vmatprep.subr.bf16.mxu0 0
      %276 = vmatpush1.bf16.msra.mxu0 0
      %277 = vmatprep.subr.bf16.mxu0 0
      %278 = vmatpush1.bf16.msra.mxu0 0
      %279 = vmatprep.subr.bf16.mxu0 %v254
      %280 = vmatpush1.bf16.msra.mxu0 %v253
      %281 = vmatprep.subr.bf16.mxu0 0
      %282 = vmatpush2.bf16.msra.mxu0 0
      %283 = vmatprep.subr.bf16.mxu0 0
      %284 = vmatpush2.bf16.msra.mxu0 0
      %285 = vmatprep.subr.bf16.mxu0 0
      %286 = vmatpush2.bf16.msra.mxu0 0
      %287 = vmatprep.subr.bf16.mxu0 0
      %288 = vmatpush2.bf16.msra.mxu0 0
      %289 = vmatprep.subr.bf16.mxu0 0
      %290 = vmatpush2.bf16.msra.mxu0 0
      %291 = vmatprep.subr.bf16.mxu0 0
      %292 = vmatpush2.bf16.msra.mxu0 0
      %293 = vmatprep.subr.bf16.mxu0 0
      %294 = vmatpush2.bf16.msra.mxu0 0
      %295 = vmatprep.subr.bf16.mxu0 0
      %296 = vmatpush2.bf16.msra.mxu0 0
      %297 = vmatprep.mubr.bf16.mxu0 0
      %298 = vmatmul.mubr.bf16.gmra.mxu0 %v263
      %v299 = vpop.f32.mrf.mxu0
      %v300 = vadd.f32 0.0, %v299
      %v301 = vpop.f32.mrf.mxu0
      %v302 = vadd.f32 0.0, %v301
      %v303 = vpop.f32.mrf.mxu0
      %v304 = vpop.f32.mrf.mxu0
      %305 = vdwg.mxu0
      %306 = vmatprep.subr.bf16.mxu0 0
      %307 = vmatpush1.bf16.msra.mxu0 0
      %308 = vmatprep.subr.bf16.mxu0 0
      %309 = vmatpush1.bf16.msra.mxu0 0
      %310 = vmatprep.subr.bf16.mxu0 0
      %311 = vmatpush1.bf16.msra.mxu0 0
      %312 = vmatprep.subr.bf16.mxu0 0
      %313 = vmatpush1.bf16.msra.mxu0 0
      %314 = vmatprep.subr.bf16.mxu0 0
      %315 = vmatpush1.bf16.msra.mxu0 0
      %316 = vmatprep.subr.bf16.mxu0 0
      %317 = vmatpush1.bf16.msra.mxu0 0
      %318 = vmatprep.subr.bf16.mxu0 0
      %319 = vmatpush1.bf16.msra.mxu0 0
      %320 = vmatprep.subr.bf16.mxu0 %v256
      %321 = vmatpush1.bf16.msra.mxu0 %v255
      %322 = vmatprep.subr.bf16.mxu0 0
      %323 = vmatpush2.bf16.msra.mxu0 0
      %324 = vmatprep.subr.bf16.mxu0 0
      %325 = vmatpush2.bf16.msra.mxu0 0
      %326 = vmatprep.subr.bf16.mxu0 0
      %327 = vmatpush2.bf16.msra.mxu0 0
      %328 = vmatprep.subr.bf16.mxu0 0
      %329 = vmatpush2.bf16.msra.mxu0 0
      %330 = vmatprep.subr.bf16.mxu0 0
      %331 = vmatpush2.bf16.msra.mxu0 0
      %332 = vmatprep.subr.bf16.mxu0 0
      %333 = vmatpush2.bf16.msra.mxu0 0
      %334 = vmatprep.subr.bf16.mxu0 0
      %335 = vmatpush2.bf16.msra.mxu0 0
      %336 = vmatprep.subr.bf16.mxu0 0
      %337 = vmatpush2.bf16.msra.mxu0 0
      %338 = vmatprep.mubr.bf16.mxu0 0
      %339 = vmatmul.mubr.bf16.gmra.mxu0 %v263
      %v340 = vpop.f32.mrf.mxu0
      %v341 = vadd.f32 0.0, %v340
      %v342 = vpop.f32.mrf.mxu0
      %v343 = vadd.f32 0.0, %v342
      %v344 = vpop.f32.mrf.mxu0
      %v345 = vpop.f32.mrf.mxu0
      %346 = vdwg.mxu0
      %v347 = vadd.f32 %v300, %v302
      %v348 = vadd.f32 %v347, %v341
      %v349 = vadd.f32 %v348, %v343
      %350 = vadd.xlane.f32.xlu0 %v349
      %v351 = vpop.xlane.xlu0 %350
      %vm352 = vcmask 7168
      %353 = vst.msk [vmem:[%s227] sm:$0xff] %vm352, %v351
      %v354 = vmul.f32 %v300, %v300
      %v355 = vmul.f32 %v302, %v302
      %v356 = vmul.f32 %v341, %v341
      %v357 = vmul.f32 %v343, %v343
      %v358 = vadd.f32 %v354, %v355
      %v359 = vadd.f32 %v358, %v356
      %v360 = vadd.f32 %v359, %v357
      %361 = vadd.xlane.f32.xlu0 %v360
      %v362 = vpop.xlane.xlu0 %361
      %363 = vst.msk [vmem:[%s233] sm:$0xff] %vm352, %v362
      %s364 = sadd.s32 %s19, %s20
      %p365 = scmp.lt.s32.totalorder %s364, 3
      %s366 = scalar_select %p365, %s364, 3
      %s367 = smul.addr %s366, 8
      %s368 = scalar_lea.vmem %s2, %s367
      %s369 = sadd.s32 %s19, %s20
      %p370 = scmp.lt.s32.totalorder %s369, 3
      %s371 = scalar_select %p370, %s369, 3
      %s372 = smul.addr %s371, 8
      %s373 = scalar_lea.vmem %s3, %s372
      // Predicated region
      $region29: #{unet_up_forward.2} parent=27 // pred_check
        %p374 = pneg %p101
      $region30: #{unet_up_forward.2} parent=27 // pred_check_branch
        %376 = sbr.rel (%p374) target = $region32
      $region31: #{unet_up_forward.2} parent=27 // pred_region
        %s377 = sadd.s32 %s19, %s20
      $region32: #{unet_up_forward.2} parent=27 // pred_fallthru
        _
      // Predicated region
      $region33: #{unet_up_forward.2} parent=27 // pred_check
        %p378 = pneg %p129
      $region34: #{unet_up_forward.2} parent=27 // pred_check_branch
        %380 = sbr.rel (%p378) target = $region36
      $region35: #{unet_up_forward.2} parent=27 // pred_region
        %s381 = sadd.s32 %s19, %s20
      $region36: #{unet_up_forward.2} parent=27 // pred_fallthru
        _
    $region28: #{unet_up_forward.2} parent=5 // pred_fallthru
      _
    %p382 = scmp.le.s32.totalorder 2, %s10
    // Predicated region
    $region37: #{unet_up_forward.2} parent=5 // pred_check
      %p383 = pneg %p382
    $region38: #{unet_up_forward.2} parent=5 // pred_check_branch
      %385 = sbr.rel (%p383) target = $region40
    $region39: #{unet_up_forward.2} parent=5 // pred_region
      %s386 = ssub.s32 %s10, 2
      // Predicated region
      $region41: #{unet_up_forward.2} parent=39 // pred_check
        %p387 = pneg %p107
      $region42: #{unet_up_forward.2} parent=39 // pred_check_branch
        %389 = sbr.rel (%p387) target = $region44
      $region43: #{unet_up_forward.2} parent=39 // pred_region
        %s390 = sadd.s32 %s21, %s22
        %p391 = scmp.lt.s32.totalorder %s390, 3
        %s392 = scalar_select %p391, %s390, 3
        %s393 = smul.addr %s392, 8
        %s394 = scalar_lea.vmem %s2, %s393
      $region44: #{unet_up_forward.2} parent=39 // pred_fallthru
        _
      // Predicated region
      $region45: #{unet_up_forward.2} parent=39 // pred_check
        %p395 = pneg %p135
      $region46: #{unet_up_forward.2} parent=39 // pred_check_branch
        %397 = sbr.rel (%p395) target = $region48
      $region47: #{unet_up_forward.2} parent=39 // pred_region
        %s398 = sadd.s32 %s21, %s22
        %p399 = scmp.lt.s32.totalorder %s398, 3
        %s400 = scalar_select %p399, %s398, 3
        %s401 = smul.addr %s400, 8
        %s402 = scalar_lea.vmem %s3, %s401
      $region48: #{unet_up_forward.2} parent=39 // pred_fallthru
        _
    $region40: #{unet_up_forward.2} parent=5 // pred_fallthru
      _
  $region6: #{unet_up_forward.2} parent=0 // loop_footer
    %s14 = sadd.s32 1, %s10
  $region7: #{unet_up_forward.2} parent=0 // loop_footer_branch
    %9 = sbr.rel target = $region3
  $region8: #{unet_up_forward.2} parent=0 // loop_exit
    _

// kernel: unet_up_forward.3
$region0: #{unet_up_forward.3}
  #allocation0 [shape = 'u32[]', space=smem, size = 0x4, offset = 0x4, fixed_abs, tag = 'smem constant byte address 0x4 - core index']
  #allocation1 [shape = 'u32[144,128]{1,0:T(1,128)}', space=vmem, size = 0x12000, scoped, tag = 'internal scratch']
  %s0 = inlined_call_operand.vmem [shape: bf16[4,16,512], index: 0, kind: input, shape index: {}]
  %s1 = inlined_call_operand.vmem [shape: bf16[4,8,16], index: 1, kind: input, shape index: {}]
  %s2 = inlined_call_operand.vmem [shape: f32[8,1], index: 2, kind: input, shape index: {}]
  %s3 = inlined_call_operand.vmem [shape: f32[8,1], index: 3, kind: input, shape index: {}]
  %s4 = inlined_call_operand.vmem [shape: f32[4,8,512], index: 4, kind: output, shape index: {}]
  %s5 = sld [smem:[#allocation0]]
  $region49: #{unet_up_forward.3} parent=0
    _
  %s7 = ssub.s32 1, %s5
  %s8 = scalar_select 0, %s7, %s5
  loop: start=0, step=1, limit=6
  $region2: #{unet_up_forward.3} parent=0 // loop_pre_header
    _
  $region3: #{unet_up_forward.3} parent=0 // loop_header
    %s10 = sphi 0, %s14
    %p11 = scmp.ge.s32.totalorder %s10, 6
    %s17 = sphi 0, %s29
    %s18 = sphi 0, %s25
    %s19 = sphi 0, %s17
    %s20 = sphi 0, %s18
    %s21 = sphi 0, %s19
    %s22 = sphi 0, %s20
    %s34 = sphi 0, %s36
    %s37 = sphi 0, %s34
    %s38 = sphi 0, %s37
    %s54 = sphi 0, %s38
    %s60 = sphi 0, %s62
    %s63 = sphi 0, %s60
    %s64 = sphi 0, %s63
    %s80 = sphi 0, %s64
    %s84 = sphi 0, %s84
    %s86 = sphi 0, %s84
    %s87 = sphi 0, %s86
    %s101 = sphi 0, %s87
    %s105 = sphi 0, %s105
    %s107 = sphi 0, %s105
    %s108 = sphi 0, %s107
    %s122 = sphi 0, %s108
    %s130 = sphi 0, %s132
    %s133 = sphi 0, %s130
    %s134 = sphi 0, %s133
    %s150 = sphi 0, %s134
  $region4: #{unet_up_forward.3} parent=0 // loop_header_branch
    %13 = sbr.rel (%p11) target = $region8
  $region5: #{unet_up_forward.3} parent=0 // loop_body
    %s15 = ssub.s32 %s10, 1
    %s16 = ssub.s32 %s10, 2
    %s23 = sadd.s32 1, %s18
    %p24 = scmp.ge.s32.totalorder %s23, 1
    %s25 = scalar_select %p24, 0, %s23
    %s26 = sadd.s32 1, %s17
    %s27 = scalar_select %p24, %s26, %s17
    %p28 = scmp.ge.s32.totalorder %s27, 4
    %s29 = scalar_select %p28, 0, %s27
    %s30 = ssub.s32 %s17, %s29
    %s31 = ssub.s32 %s18, %s25
    %s32 = sor.u32 %s30, %s31
    %p33 = scmp.eq.s32.totalorder %s32, 0
    %s35 = sadd.s32 %s34, 1
    %s36 = scalar_select %p33, %s34, %s35
    %p39 = pneg %p33
    %p40 = scmp.eq.s32.totalorder %s10, 3
    %p41 = por %p39, %p40
    %p42 = scmp.ne.s32.totalorder %s34, %s37
    %p43 = scmp.eq.s32.totalorder %s10, 0
    %p44 = por %p42, %p43
    %p45 = scmp.ne.s32.totalorder %s34, %s37
    %p46 = scmp.eq.s32.totalorder %s15, 3
    %p47 = por %p45, %p46
    %p48 = scmp.ne.s32.totalorder %s37, %s38
    %p49 = scmp.eq.s32.totalorder %s15, 0
    %p50 = por %p48, %p49
    %p51 = scmp.ne.s32.totalorder %s37, %s38
    %p52 = scmp.eq.s32.totalorder %s16, 3
    %p53 = por %p51, %p52
    %p55 = scmp.ne.s32.totalorder %s38, %s54
    %p56 = scmp.eq.s32.totalorder %s16, 0
    %p57 = por %p55, %p56
    %s58 = ssub.s32 %s17, %s29
    %p59 = scmp.eq.s32.totalorder %s58, 0
    %s61 = sadd.s32 %s60, 1
    %s62 = scalar_select %p59, %s60, %s61
    %p65 = pneg %p59
    %p66 = scmp.eq.s32.totalorder %s10, 3
    %p67 = por %p65, %p66
    %p68 = scmp.ne.s32.totalorder %s60, %s63
    %p69 = scmp.eq.s32.totalorder %s10, 0
    %p70 = por %p68, %p69
    %p71 = scmp.ne.s32.totalorder %s60, %s63
    %p72 = scmp.eq.s32.totalorder %s15, 3
    %p73 = por %p71, %p72
    %p74 = scmp.ne.s32.totalorder %s63, %s64
    %p75 = scmp.eq.s32.totalorder %s15, 0
    %p76 = por %p74, %p75
    %p77 = scmp.ne.s32.totalorder %s63, %s64
    %p78 = scmp.eq.s32.totalorder %s16, 3
    %p79 = por %p77, %p78
    %p81 = scmp.ne.s32.totalorder %s64, %s80
    %p82 = scmp.eq.s32.totalorder %s16, 0
    %p83 = por %p81, %p82
    %s85 = sadd.s32 %s84, 1
    %p88 = scmp.eq.s32.totalorder %s10, 3
    %p89 = scmp.ne.s32.totalorder %s84, %s86
    %p90 = scmp.eq.s32.totalorder %s10, 0
    %p91 = por %p89, %p90
    %p92 = scmp.ne.s32.totalorder %s84, %s86
    %p93 = scmp.eq.s32.totalorder %s15, 3
    %p94 = por %p92, %p93
    %p95 = scmp.ne.s32.totalorder %s86, %s87
    %p96 = scmp.eq.s32.totalorder %s15, 0
    %p97 = por %p95, %p96
    %p98 = scmp.ne.s32.totalorder %s86, %s87
    %p99 = scmp.eq.s32.totalorder %s16, 3
    %p100 = por %p98, %p99
    %p102 = scmp.ne.s32.totalorder %s87, %s101
    %p103 = scmp.eq.s32.totalorder %s16, 0
    %p104 = por %p102, %p103
    %s106 = sadd.s32 %s105, 1
    %p109 = scmp.eq.s32.totalorder %s10, 3
    %p110 = scmp.ne.s32.totalorder %s105, %s107
    %p111 = scmp.eq.s32.totalorder %s10, 0
    %p112 = por %p110, %p111
    %p113 = scmp.ne.s32.totalorder %s105, %s107
    %p114 = scmp.eq.s32.totalorder %s15, 3
    %p115 = por %p113, %p114
    %p116 = scmp.ne.s32.totalorder %s107, %s108
    %p117 = scmp.eq.s32.totalorder %s15, 0
    %p118 = por %p116, %p117
    %p119 = scmp.ne.s32.totalorder %s107, %s108
    %p120 = scmp.eq.s32.totalorder %s16, 3
    %p121 = por %p119, %p120
    %p123 = scmp.ne.s32.totalorder %s108, %s122
    %p124 = scmp.eq.s32.totalorder %s16, 0
    %p125 = por %p123, %p124
    %s126 = ssub.s32 %s17, %s29
    %s127 = ssub.s32 %s18, %s25
    %s128 = sor.u32 %s126, %s127
    %p129 = scmp.eq.s32.totalorder %s128, 0
    %s131 = sadd.s32 %s130, 1
    %s132 = scalar_select %p129, %s130, %s131
    %p135 = pneg %p129
    %p136 = scmp.eq.s32.totalorder %s10, 3
    %p137 = por %p135, %p136
    %p138 = scmp.ne.s32.totalorder %s130, %s133
    %p139 = scmp.eq.s32.totalorder %s10, 0
    %p140 = por %p138, %p139
    %p141 = scmp.ne.s32.totalorder %s130, %s133
    %p142 = scmp.eq.s32.totalorder %s15, 3
    %p143 = por %p141, %p142
    %p144 = scmp.ne.s32.totalorder %s133, %s134
    %p145 = scmp.eq.s32.totalorder %s15, 0
    %p146 = por %p144, %p145
    %p147 = scmp.ne.s32.totalorder %s133, %s134
    %p148 = scmp.eq.s32.totalorder %s16, 3
    %p149 = por %p147, %p148
    %p151 = scmp.ne.s32.totalorder %s134, %s150
    %p152 = scmp.eq.s32.totalorder %s16, 0
    %p153 = por %p151, %p152
    %p154 = scmp.le.s32.totalorder 1, %s10
    %p155 = scmp.lt.s32.totalorder %s10, 5
    %p156 = pnand %p154, %p155
    %p157 = pneg %p156
    // Predicated region
    $region9: #{unet_up_forward.3} parent=5 // pred_check
      _
    $region10: #{unet_up_forward.3} parent=5 // pred_check_branch
      %159 = sbr.rel (%p156) target = $region12
    $region11: #{unet_up_forward.3} parent=5 // pred_region
      %s160 = ssub.s32 %s10, 1
      // Predicated region
      $region13: #{unet_up_forward.3} parent=11 // pred_check
        %p161 = pneg %p97
      $region14: #{unet_up_forward.3} parent=11 // pred_check_branch
        %163 = sbr.rel (%p161) target = $region16
      $region15: #{unet_up_forward.3} parent=11 // pred_region
        _
      $region16: #{unet_up_forward.3} parent=11 // pred_fallthru
        _
      // Predicated region
      $region17: #{unet_up_forward.3} parent=11 // pred_check
        %p164 = pneg %p118
      $region18: #{unet_up_forward.3} parent=11 // pred_check_branch
        %166 = sbr.rel (%p164) target = $region20
      $region19: #{unet_up_forward.3} parent=11 // pred_region
        _
      $region20: #{unet_up_forward.3} parent=11 // pred_fallthru
        _
    $region12: #{unet_up_forward.3} parent=5 // pred_fallthru
      _
    %p167 = scmp.lt.s32.totalorder %s10, 4
    // Predicated region
    $region21: #{unet_up_forward.3} parent=5 // pred_check
      %p168 = pneg %p167
    $region22: #{unet_up_forward.3} parent=5 // pred_check_branch
      %170 = sbr.rel (%p168) target = $region24
    $region23: #{unet_up_forward.3} parent=5 // pred_region
      // Predicated region
      $region25: #{unet_up_forward.3} parent=23 // pred_check
        %p171 = pneg %p44
      $region26: #{unet_up_forward.3} parent=23 // pred_check_branch
        %173 = sbr.rel (%p171) target = $region28
      $region27: #{unet_up_forward.3} parent=23 // pred_region
        %s174 = smul.u32 4, %s18
        %p175 = scmp.lt.s32.totalorder %s17, 3
        %s176 = scalar_select %p175, %s17, 3
        %p177 = scmp.lt.s32.totalorder %s174, 3
        %s178 = scalar_select %p177, %s174, 3
        %s179 = smul.addr %s176, 8
        %s180 = sadd.s32 %s178, %s179
        %s181 = smul.addr %s180, 4
        %s182 = scalar_lea.vmem %s0, %s181
        %s183 = smul.u32 4, %s18
      $region28: #{unet_up_forward.3} parent=23 // pred_fallthru
        _
      // Predicated region
      $region29: #{unet_up_forward.3} parent=23 // pred_check
        %p184 = pneg %p70
      $region30: #{unet_up_forward.3} parent=23 // pred_check_branch
        %186 = sbr.rel (%p184) target = $region32
      $region31: #{unet_up_forward.3} parent=23 // pred_region
        %p187 = scmp.lt.s32.totalorder %s17, 3
        %s188 = scalar_select %p187, %s17, 3
        %s189 = smul.addr %s188, 4
        %s190 = scalar_lea.vmem %s1, %s189
      $region32: #{unet_up_forward.3} parent=23 // pred_fallthru
        _
    $region24: #{unet_up_forward.3} parent=5 // pred_fallthru
      _
    %p191 = scmp.le.s32.totalorder 1, %s10
    %p192 = scmp.lt.s32.totalorder %s10, 5
    %p193 = pnand %p191, %p192
    %p194 = pneg %p193
    // Predicated region
    $region33: #{unet_up_forward.3} parent=5 // pred_check
      _
    $region34: #{unet_up_forward.3} parent=5 // pred_check_branch
      %196 = sbr.rel (%p193) target = $region36
    $region35: #{unet_up_forward.3} parent=5 // pred_region
      %s197 = ssub.s32 %s10, 1
      %s198 = smul.u32 4, %s20
      %p199 = scmp.lt.s32.totalorder %s19, 3
      %s200 = scalar_select %p199, %s19, 3
      %p201 = scmp.lt.s32.totalorder %s198, 3
      %s202 = scalar_select %p201, %s198, 3
      %s203 = smul.addr %s200, 8
      %s204 = sadd.s32 %s202, %s203
      %s205 = smul.addr %s204, 4
      %s206 = scalar_lea.vmem %s0, %s205
      %p207 = pneg %p50
      %p208 = pneg %p47
      %p209 = scmp.lt.s32.totalorder %s19, 3
      %s210 = scalar_select %p209, %s19, 3
      %s211 = smul.addr %s210, 4
      %s212 = scalar_lea.vmem %s1, %s211
      %p213 = pneg %p76
      %p214 = pneg %p73
      %p215 = pneg %p97
      %p216 = pneg %p94
      %p217 = pneg %p118
      %p218 = pneg %p115
      %p219 = pneg %p146
      %p220 = pneg %p143
      %s221 = smul.u32 4, %s20
      %p222 = scmp.lt.s32.totalorder %s19, 3
      %s223 = scalar_select %p222, %s19, 3
      %p224 = scmp.lt.s32.totalorder %s221, 3
      %s225 = scalar_select %p224, %s221, 3
      %s226 = smul.addr %s223, 4
      %s227 = sadd.s32 %s225, %s226
      %s228 = smul.addr %s227, 8
      %s229 = scalar_lea.vmem %s4, %s228
      %s230 = smul.u32 4, %s20
      %p231 = scmp.lt.s32.totalorder %s19, 3
      %s232 = scalar_select %p231, %s19, 3
      %p233 = scmp.lt.s32.totalorder %s230, 3
      %s234 = scalar_select %p233, %s230, 3
      %s235 = smul.addr %s232, 8
      %s236 = sadd.s32 %s234, %s235
      %s237 = smul.addr %s236, 4
      %s238 = scalar_lea.vmem %s0, %s237
      %s239 = smul.u32 4, %s20
      %p240 = scmp.lt.s32.totalorder %s19, 3
      %s241 = scalar_select %p240, %s19, 3
      %s242 = smul.addr %s241, 4
      %s243 = scalar_lea.vmem %s1, %s242
      %s244 = smul.u32 4, %s20
      %p245 = scmp.lt.s32.totalorder %s19, 3
      %s246 = scalar_select %p245, %s19, 3
      %p247 = scmp.lt.s32.totalorder %s244, 3
      %s248 = scalar_select %p247, %s244, 3
      %s249 = smul.addr %s246, 4
      %s250 = sadd.s32 %s248, %s249
      %s251 = smul.addr %s250, 8
      %s252 = scalar_lea.vmem %s4, %s251
      %s253 = smul.u32 4, %s20
      %v255 = vld [vmem:[%s243] sm:$0xf]
      %v256 = vld [vmem:[%s238] sm:$0xff]
      %v257 = vld [vmem:[%s238 + $0x8] sm:$0xff]
      %v258 = vld [vmem:[%s238 + $0x10] sm:$0xff]
      %v259 = vld [vmem:[%s238 + $0x18] sm:$0xff]
      %v264 = vunpack.c.l.b16 %v256
      %v265 = vunpack.c.h.b16 %v256
      %v266 = vunpack.c.l.b16 %v257
      %v267 = vunpack.c.h.b16 %v257
      %v268 = vunpack.c.l.b16 %v258
      %v269 = vunpack.c.h.b16 %v258
      %v270 = vunpack.c.l.b16 %v259
      %v271 = vunpack.c.h.b16 %v259
      %v272 = vpack.c.b16 %v268, %v264
      %v273 = vpack.c.b16 %v269, %v265
      %v274 = vpack.c.b16 %v270, %v266
      %v275 = vpack.c.b16 %v271, %v267
      %vm280 = vcmask 130048
      %v282 = vsel %vm280, %v255, 0
      %284 = vmatprep.subr.bf16.mxu0 0
      %285 = vmatpush1.bf16.msra.mxu0 0
      %286 = vmatprep.subr.bf16.mxu0 0
      %287 = vmatpush1.bf16.msra.mxu0 0
      %288 = vmatprep.subr.bf16.mxu0 0
      %289 = vmatpush1.bf16.msra.mxu0 0
      %290 = vmatprep.subr.bf16.mxu0 0
      %291 = vmatpush1.bf16.msra.mxu0 0
      %292 = vmatprep.subr.bf16.mxu0 0
      %293 = vmatpush1.bf16.msra.mxu0 0
      %294 = vmatprep.subr.bf16.mxu0 0
      %295 = vmatpush1.bf16.msra.mxu0 0
      %296 = vmatprep.subr.bf16.mxu0 0
      %297 = vmatpush1.bf16.msra.mxu0 0
      %298 = vmatprep.subr.bf16.mxu0 %v273
      %299 = vmatpush1.bf16.msra.mxu0 %v272
      %300 = vmatprep.subr.bf16.mxu0 0
      %301 = vmatpush2.bf16.msra.mxu0 0
      %302 = vmatprep.subr.bf16.mxu0 0
      %303 = vmatpush2.bf16.msra.mxu0 0
      %304 = vmatprep.subr.bf16.mxu0 0
      %305 = vmatpush2.bf16.msra.mxu0 0
      %306 = vmatprep.subr.bf16.mxu0 0
      %307 = vmatpush2.bf16.msra.mxu0 0
      %308 = vmatprep.subr.bf16.mxu0 0
      %309 = vmatpush2.bf16.msra.mxu0 0
      %310 = vmatprep.subr.bf16.mxu0 0
      %311 = vmatpush2.bf16.msra.mxu0 0
      %312 = vmatprep.subr.bf16.mxu0 0
      %313 = vmatpush2.bf16.msra.mxu0 0
      %314 = vmatprep.subr.bf16.mxu0 0
      %315 = vmatpush2.bf16.msra.mxu0 0
      %316 = vmatprep.mubr.bf16.mxu0 0
      %317 = vmatmul.mubr.bf16.gmra.mxu0 %v282
      %v318 = vpop.f32.mrf.mxu0
      %v319 = vadd.f32 0.0, %v318
      %v320 = vpop.f32.mrf.mxu0
      %v321 = vadd.f32 0.0, %v320
      %v322 = vpop.f32.mrf.mxu0
      %v323 = vpop.f32.mrf.mxu0
      %324 = vdwg.mxu0
      %325 = vmatprep.subr.bf16.mxu0 0
      %326 = vmatpush1.bf16.msra.mxu0 0
      %327 = vmatprep.subr.bf16.mxu0 0
      %328 = vmatpush1.bf16.msra.mxu0 0
      %329 = vmatprep.subr.bf16.mxu0 0
      %330 = vmatpush1.bf16.msra.mxu0 0
      %331 = vmatprep.subr.bf16.mxu0 0
      %332 = vmatpush1.bf16.msra.mxu0 0
      %333 = vmatprep.subr.bf16.mxu0 0
      %334 = vmatpush1.bf16.msra.mxu0 0
      %335 = vmatprep.subr.bf16.mxu0 0
      %336 = vmatpush1.bf16.msra.mxu0 0
      %337 = vmatprep.subr.bf16.mxu0 0
      %338 = vmatpush1.bf16.msra.mxu0 0
      %339 = vmatprep.subr.bf16.mxu0 %v275
      %340 = vmatpush1.bf16.msra.mxu0 %v274
      %341 = vmatprep.subr.bf16.mxu0 0
      %342 = vmatpush2.bf16.msra.mxu0 0
      %343 = vmatprep.subr.bf16.mxu0 0
      %344 = vmatpush2.bf16.msra.mxu0 0
      %345 = vmatprep.subr.bf16.mxu0 0
      %346 = vmatpush2.bf16.msra.mxu0 0
      %347 = vmatprep.subr.bf16.mxu0 0
      %348 = vmatpush2.bf16.msra.mxu0 0
      %349 = vmatprep.subr.bf16.mxu0 0
      %350 = vmatpush2.bf16.msra.mxu0 0
      %351 = vmatprep.subr.bf16.mxu0 0
      %352 = vmatpush2.bf16.msra.mxu0 0
      %353 = vmatprep.subr.bf16.mxu0 0
      %354 = vmatpush2.bf16.msra.mxu0 0
      %355 = vmatprep.subr.bf16.mxu0 0
      %356 = vmatpush2.bf16.msra.mxu0 0
      %357 = vmatprep.mubr.bf16.mxu0 0
      %358 = vmatmul.mubr.bf16.gmra.mxu0 %v282
      %v359 = vpop.f32.mrf.mxu0
      %v360 = vadd.f32 0.0, %v359
      %v361 = vpop.f32.mrf.mxu0
      %v362 = vadd.f32 0.0, %v361
      %v363 = vpop.f32.mrf.mxu0
      %v364 = vpop.f32.mrf.mxu0
      %365 = vdwg.mxu0
      %v366 = vld [vmem:[%s2] sm:$0xff]
      %368 = vset.pattern.permute.xlu0 0
      %369 = vperm.xlu0 %368, %v366
      %v370 = vpop.permute.xlu0 %369
      %v372 = vmul.f32 %v319, %v370
      %v373 = vmul.f32 %v321, %v370
      %v374 = vmul.f32 %v360, %v370
      %v375 = vmul.f32 %v362, %v370
      %v376 = vld [vmem:[%s3] sm:$0xff]
      %378 = vset.pattern.permute.xlu0 0
      %379 = vperm.xlu0 %378, %v376
      %v380 = vpop.permute.xlu0 %379
      %v382 = vadd.f32 %v372, %v380
      %v383 = vadd.f32 %v373, %v380
      %v384 = vadd.f32 %v374, %v380
      %v385 = vadd.f32 %v375, %v380
      %v386 = vmax.f32 %v382, 0.0
      %v387 = vmax.f32 %v383, 0.0
      %v388 = vmax.f32 %v384, 0.0
      %v389 = vmax.f32 %v385, 0.0
      %390 = vst [vmem:[%s252] sm:$0xff] %v386
      %391 = vst [vmem:[%s252 + $0x8] sm:$0xff] %v387
      %392 = vst [vmem:[%s252 + $0x10] sm:$0xff] %v388
      %393 = vst [vmem:[%s252 + $0x18] sm:$0xff] %v389
      %s394 = smul.u32 4, %s20
      %p395 = scmp.lt.s32.totalorder %s19, 3
      %s396 = scalar_select %p395, %s19, 3
      %p397 = scmp.lt.s32.totalorder %s394, 3
      %s398 = scalar_select %p397, %s394, 3
      %s399 = smul.addr %s396, 4
      %s400 = sadd.s32 %s398, %s399
      %s401 = smul.addr %s400, 8
      %s402 = scalar_lea.vmem %s4, %s401
      // Predicated region
      $region37: #{unet_up_forward.3} parent=35 // pred_check
        %p403 = pneg %p143
      $region38: #{unet_up_forward.3} parent=35 // pred_check_branch
        %405 = sbr.rel (%p403) target = $region40
      $region39: #{unet_up_forward.3} parent=35 // pred_region
        %s406 = smul.u32 4, %s20
      $region40: #{unet_up_forward.3} parent=35 // pred_fallthru
        _
    $region36: #{unet_up_forward.3} parent=5 // pred_fallthru
      _
    %p407 = scmp.le.s32.totalorder 2, %s10
    // Predicated region
    $region41: #{unet_up_forward.3} parent=5 // pred_check
      %p408 = pneg %p407
    $region42: #{unet_up_forward.3} parent=5 // pred_check_branch
      %410 = sbr.rel (%p408) target = $region44
    $region43: #{unet_up_forward.3} parent=5 // pred_region
      %s411 = ssub.s32 %s10, 2
      // Predicated region
      $region45: #{unet_up_forward.3} parent=43 // pred_check
        %p412 = pneg %p149
      $region46: #{unet_up_forward.3} parent=43 // pred_check_branch
        %414 = sbr.rel (%p412) target = $region48
      $region47: #{unet_up_forward.3} parent=43 // pred_region
        %s415 = smul.u32 4, %s22
        %p416 = scmp.lt.s32.totalorder %s21, 3
        %s417 = scalar_select %p416, %s21, 3
        %p418 = scmp.lt.s32.totalorder %s415, 3
        %s419 = scalar_select %p418, %s415, 3
        %s420 = smul.addr %s417, 4
        %s421 = sadd.s32 %s419, %s420
        %s422 = smul.addr %s421, 8
        %s423 = scalar_lea.vmem %s4, %s422
      $region48: #{unet_up_forward.3} parent=43 // pred_fallthru
        _
    $region44: #{unet_up_forward.3} parent=5 // pred_fallthru
      _
  $region6: #{unet_up_forward.3} parent=0 // loop_footer
    %s14 = sadd.s32 1, %s10
  $region7: #{unet_up_forward.3} parent=0 // loop_footer_branch
    %9 = sbr.rel target = $region3
  $region8: #{unet_up_forward.3} parent=0 // loop_exit
    _

</llo_original>
